<compile_context>
chip_gen: v7x
topology: tpu7x:2x2x1
jax: 0.10.0
libtpu: 0.0.40
codegen_flags: <defaults>
</compile_context>

<pallas_src>
import jax
import jax.numpy as jnp
from jax.experimental import pallas as pl
from jax.experimental.pallas import tpu as pltpu

SMOOTH = 1e-05

_VMEM_TILE_BUDGET = 8 * 1024 * 1024   # bytes for 2 inputs x 2 pipeline buffers
_VMEM_LIMIT = 32 * 1024 * 1024        # safe on v5e/v6e (128 MiB) and v7x (64 MiB)


# ----------------------------------------------------------------------------
# Fast path: D is a multiple of 128 -> lane-dense (N, R, 128) layout.
# ----------------------------------------------------------------------------
def _pick_tile_rows(n, r, itemsize):
    """Rows per tile so 2 inputs x 2 buffers x (n, tr, 128) fits the budget."""
    tr = _VMEM_TILE_BUDGET // (4 * n * 128 * itemsize)
    tr = min(max(tr, 8), 4096)
    if r <= tr:
        return r                      # one tile covers all rows exactly
    return max(8, (tr // 8) * 8)      # multiple of 8 sublanes


def _make_rows_kernel(n_rows, tile_rows, tiles_per_chunk, need_mask):
    def kernel(x_ref, t_ref, inter_ref, denom_ref):
        k = pl.program_id(1)

        @pl.when(k == 0)
        def _init():
            inter_ref[...] = jnp.zeros_like(inter_ref)
            denom_ref[...] = jnp.zeros_like(denom_ref)

        x = x_ref[...].astype(jnp.float32)    # (N, tile_rows, 128)
        t = t_ref[...].astype(jnp.float32)
        prod = x * t
        ssum = x + t

        if need_mask:
            p = pl.program_id(0)
            row0 = (p * tiles_per_chunk + k) * tile_rows
            rows = row0 + jax.lax.broadcasted_iota(jnp.int32, x.shape, 1)
            valid = rows < n_rows
            prod = jnp.where(valid, prod, 0.0)
            ssum = jnp.where(valid, ssum, 0.0)

        # Lane-wide per-sample partials; cross-lane reduce deferred to wrapper.
        inter_ref[...] += jnp.sum(prod, axis=1)   # (N, 128)
        denom_ref[...] += jnp.sum(ssum, axis=1)   # (N, 128)

    return kernel


def _dice_partials_rows(x, t, n, d):
    r = d // 128
    xr = x.reshape(n, r, 128)
    tr = t.reshape(n, r, 128)
    itemsize = jnp.dtype(x.dtype).itemsize
    tile_rows = _pick_tile_rows(n, r, itemsize)
    num_tiles = pl.cdiv(r, tile_rows)
    n_par = 2 if num_tiles >= 2 else 1          # megacore sharding on v7x
    k_per = pl.cdiv(num_tiles, n_par)
    need_mask = (n_par * k_per * tile_rows) != r

    def in_map(pi, ki):
        # Clamp so overflow iterations re-read the last valid tile; their
        # contribution is masked to zero in-kernel.
        return (0, jnp.minimum(pi * k_per + ki, num_tiles - 1), 0)

    kernel = _make_rows_kernel(r, tile_rows, k_per, need_mask)
    out_sds = jax.ShapeDtypeStruct((n_par, n, 128), jnp.float32)

    inter, denom = pl.pallas_call(
        kernel,
        out_shape=(out_sds, out_sds),
        grid_spec=pltpu.PrefetchScalarGridSpec(
            num_scalar_prefetch=0,
            grid=(n_par, k_per),
            in_specs=[
                pl.BlockSpec((n, tile_rows, 128), in_map),
                pl.BlockSpec((n, tile_rows, 128), in_map),
            ],
            out_specs=(
                pl.BlockSpec((None, n, 128), lambda pi, ki: (pi, 0, 0)),
                pl.BlockSpec((None, n, 128), lambda pi, ki: (pi, 0, 0)),
            ),
        ),
        compiler_params=pltpu.CompilerParams(
            dimension_semantics=("parallel", "arbitrary"),
            vmem_limit_bytes=_VMEM_LIMIT,
        ),
    )(xr, tr)
    return inter.sum(axis=(0, 2)), denom.sum(axis=(0, 2))


# ----------------------------------------------------------------------------
# Fallback path: D not a multiple of 128 -> (N, D) tiles with lane masking.
# ----------------------------------------------------------------------------
def _make_flat_kernel(d, tile_d, need_mask):
    def kernel(x_ref, t_ref, inter_ref, denom_ref):
        k = pl.program_id(0)

        @pl.when(k == 0)
        def _init():
            inter_ref[...] = jnp.zeros_like(inter_ref)
            denom_ref[...] = jnp.zeros_like(denom_ref)

        x = x_ref[...].astype(jnp.float32)    # (N, tile_d)
        t = t_ref[...].astype(jnp.float32)
        prod = x * t
        ssum = x + t

        if need_mask:
            cols = k * tile_d + jax.lax.broadcasted_iota(jnp.int32, x.shape, 1)
            valid = cols < d
            prod = jnp.where(valid, prod, 0.0)
            ssum = jnp.where(valid, ssum, 0.0)

        inter_ref[...] += jnp.sum(prod, axis=1, keepdims=True)   # (N, 1)
        denom_ref[...] += jnp.sum(ssum, axis=1, keepdims=True)   # (N, 1)

    return kernel


def _dice_partials_flat(x, t, n, d):
    itemsize = jnp.dtype(x.dtype).itemsize
    if d <= 128:
        tile_d = d
    else:
        tile_d = _VMEM_TILE_BUDGET // (4 * n * itemsize)
        tile_d = max(128, (tile_d // 128) * 128)
        tile_d = min(tile_d, ((d + 127) // 128) * 128)
    num_tiles = pl.cdiv(d, tile_d)
    need_mask = (num_tiles * tile_d) != d

    kernel = _make_flat_kernel(d, tile_d, need_mask)
    out_sds = jax.ShapeDtypeStruct((n, 1), jnp.float32)

    inter, denom = pl.pallas_call(
        kernel,
        out_shape=(out_sds, out_sds),
        grid_spec=pltpu.PrefetchScalarGridSpec(
            num_scalar_prefetch=0,
            grid=(num_tiles,),
            in_specs=[
                pl.BlockSpec((n, tile_d), lambda ki: (0, ki)),
                pl.BlockSpec((n, tile_d), lambda ki: (0, ki)),
            ],
            out_specs=(
                pl.BlockSpec((n, 1), lambda ki: (0, 0)),
                pl.BlockSpec((n, 1), lambda ki: (0, 0)),
            ),
        ),
        compiler_params=pltpu.CompilerParams(
            dimension_semantics=("arbitrary",),
            vmem_limit_bytes=_VMEM_LIMIT,
        ),
    )(x, t)
    return inter[:, 0], denom[:, 0]


# ----------------------------------------------------------------------------
# Public wrapper: matches BinaryDiceLoss.forward.
# ----------------------------------------------------------------------------
def binary_dice_loss(inp, target):
    """Pallas implementation of BinaryDiceLoss.forward. Returns scalar f32."""
    n = inp.shape[0]
    d = 1
    for s in inp.shape[1:]:
        d *= s
    x = inp.reshape(n, d)
    t = target.reshape(n, d)

    if d >= 128 and d % 128 == 0:
        inter, denom = _dice_partials_rows(x, t, n, d)
    else:
        inter, denom = _dice_partials_flat(x, t, n, d)

    dice = (2.0 * inter + SMOOTH) / (denom + SMOOTH)
    return (1.0 - jnp.sum(dice) / n).astype(jnp.float32)


def _reference(inp, target):
    n = inp.shape[0]
    x = inp.reshape(n, -1).astype(jnp.float32)
    t = target.reshape(n, -1).astype(jnp.float32)
    inter = jnp.sum(x * t, axis=1)
    dice = (2.0 * inter + SMOOTH) / (jnp.sum(x, axis=1) + jnp.sum(t, axis=1) + SMOOTH)
    return 1.0 - jnp.sum(dice) / n


if __name__ == "__main__":
    key = jax.random.PRNGKey(0)
    k1, k2 = jax.random.split(key)
    # NCHW inputs, as a segmentation head would produce.
    x = jax.nn.sigmoid(jax.random.normal(k1, (2, 4, 16, 16), dtype=jnp.float32))
    tgt = (jax.random.uniform(k2, (2, 4, 16, 16)) > 0.5).astype(jnp.float32)

    loss_fn = jax.jit(binary_dice_loss)
    loss = jax.block_until_ready(loss_fn(x, tgt))
    ref = jax.block_until_ready(_reference(x, tgt))
    assert jnp.allclose(loss, ref, atol=1e-5, rtol=1e-5), (loss, ref)
    print("KERNEL_OK")
</pallas_src>

<mosaic_0001>
module attributes {stable_mosaic.version = 11 : i64} {
  func.func @kernel(%arg0: i32, %arg1: i32, %arg2: memref<2x8x128xf32, #tpu.memory_space<vmem>>, %arg3: memref<2x8x128xf32, #tpu.memory_space<vmem>>, %arg4: memref<1x2x128xf32, #tpu.memory_space<vmem>>, %arg5: memref<1x2x128xf32, #tpu.memory_space<vmem>>) attributes {dimension_semantics = [#tpu.dimension_semantics<parallel>, #tpu.dimension_semantics<arbitrary>], iteration_bounds = array<i64: 1, 1>, scalar_prefetch = 0 : i64, scratch_operands = 0 : i64, tpu.core_type = #tpu.core_type<tc>, window_params = [{transform_indices = @transform_0, window_bounds = array<i64: 2, 8, 128>}, {transform_indices = @transform_1, window_bounds = array<i64: 2, 8, 128>}, {transform_indices = @transform_2, window_bounds = array<i64: 1, 2, 128>}, {transform_indices = @transform_3, window_bounds = array<i64: 1, 2, 128>}]} {
    %c0_i32 = arith.constant 0 : i32
    %0 = arith.cmpi eq, %arg1, %c0_i32 : i32
    %1 = arith.extui %0 : i1 to i32
    %c0_i32_0 = arith.constant 0 : i32
    %2 = arith.cmpi ne, %1, %c0_i32_0 : i32
    scf.if %2 {
      %cst_19 = arith.constant 0.000000e+00 : f32
      %21 = vector.broadcast %cst_19 : f32 to vector<2x128xf32>
      %c0_20 = arith.constant 0 : index
      %c0_21 = arith.constant 0 : index
      %c0_22 = arith.constant 0 : index
      %22 = vector.load %arg4[%c0_20, %c0_21, %c0_22] : memref<1x2x128xf32, #tpu.memory_space<vmem>>, vector<1x2x128xf32>
      %23 = vector.shape_cast %22 : vector<1x2x128xf32> to vector<2x128xf32>
      %24 = vector.shape_cast %21 : vector<2x128xf32> to vector<1x2x128xf32>
      tpu.vector_store %arg4[%c0_20, %c0_21, %c0_22], %24 {strides = array<i32>} : memref<1x2x128xf32, #tpu.memory_space<vmem>>, vector<1x2x128xf32>,
      %cst_23 = arith.constant 0.000000e+00 : f32
      %25 = vector.broadcast %cst_23 : f32 to vector<2x128xf32>
      %c0_24 = arith.constant 0 : index
      %c0_25 = arith.constant 0 : index
      %c0_26 = arith.constant 0 : index
      %26 = vector.load %arg5[%c0_24, %c0_25, %c0_26] : memref<1x2x128xf32, #tpu.memory_space<vmem>>, vector<1x2x128xf32>
      %27 = vector.shape_cast %26 : vector<1x2x128xf32> to vector<2x128xf32>
      %28 = vector.shape_cast %25 : vector<2x128xf32> to vector<1x2x128xf32>
      tpu.vector_store %arg5[%c0_24, %c0_25, %c0_26], %28 {strides = array<i32>} : memref<1x2x128xf32, #tpu.memory_space<vmem>>, vector<1x2x128xf32>,
    } else {
    }
    %c0 = arith.constant 0 : index
    %c0_1 = arith.constant 0 : index
    %c0_2 = arith.constant 0 : index
    %3 = vector.load %arg2[%c0, %c0_1, %c0_2] : memref<2x8x128xf32, #tpu.memory_space<vmem>>, vector<2x8x128xf32>
    %c0_3 = arith.constant 0 : index
    %c0_4 = arith.constant 0 : index
    %c0_5 = arith.constant 0 : index
    %4 = vector.load %arg3[%c0_3, %c0_4, %c0_5] : memref<2x8x128xf32, #tpu.memory_space<vmem>>, vector<2x8x128xf32>
    %5 = arith.mulf %3, %4 : vector<2x8x128xf32>
    %6 = arith.addf %3, %4 : vector<2x8x128xf32>
    %c0_6 = arith.constant 0 : index
    %c0_7 = arith.constant 0 : index
    %c0_8 = arith.constant 0 : index
    %7 = vector.load %arg4[%c0_6, %c0_7, %c0_8] : memref<1x2x128xf32, #tpu.memory_space<vmem>>, vector<1x2x128xf32>
    %8 = vector.shape_cast %7 : vector<1x2x128xf32> to vector<2x128xf32>
    %cst = arith.constant dense<0.000000e+00> : vector<2x128xf32>
    %9 = vector.multi_reduction <add>, %5, %cst [1] : vector<2x8x128xf32> to vector<2x128xf32>
    %10 = arith.addf %8, %9 : vector<2x128xf32>
    %c0_9 = arith.constant 0 : index
    %c0_10 = arith.constant 0 : index
    %c0_11 = arith.constant 0 : index
    %11 = vector.load %arg4[%c0_9, %c0_10, %c0_11] : memref<1x2x128xf32, #tpu.memory_space<vmem>>, vector<1x2x128xf32>
    %12 = vector.shape_cast %11 : vector<1x2x128xf32> to vector<2x128xf32>
    %13 = vector.shape_cast %10 : vector<2x128xf32> to vector<1x2x128xf32>
    tpu.vector_store %arg4[%c0_9, %c0_10, %c0_11], %13 {strides = array<i32>} : memref<1x2x128xf32, #tpu.memory_space<vmem>>, vector<1x2x128xf32>,
    %c0_12 = arith.constant 0 : index
    %c0_13 = arith.constant 0 : index
    %c0_14 = arith.constant 0 : index
    %14 = vector.load %arg5[%c0_12, %c0_13, %c0_14] : memref<1x2x128xf32, #tpu.memory_space<vmem>>, vector<1x2x128xf32>
    %15 = vector.shape_cast %14 : vector<1x2x128xf32> to vector<2x128xf32>
    %cst_15 = arith.constant dense<0.000000e+00> : vector<2x128xf32>
    %16 = vector.multi_reduction <add>, %6, %cst_15 [1] : vector<2x8x128xf32> to vector<2x128xf32>
    %17 = arith.addf %15, %16 : vector<2x128xf32>
    %c0_16 = arith.constant 0 : index
    %c0_17 = arith.constant 0 : index
    %c0_18 = arith.constant 0 : index
    %18 = vector.load %arg5[%c0_16, %c0_17, %c0_18] : memref<1x2x128xf32, #tpu.memory_space<vmem>>, vector<1x2x128xf32>
    %19 = vector.shape_cast %18 : vector<1x2x128xf32> to vector<2x128xf32>
    %20 = vector.shape_cast %17 : vector<2x128xf32> to vector<1x2x128xf32>
    tpu.vector_store %arg5[%c0_16, %c0_17, %c0_18], %20 {strides = array<i32>} : memref<1x2x128xf32, #tpu.memory_space<vmem>>, vector<1x2x128xf32>,
    return
  }
  func.func @transform_0(%arg0: i32, %arg1: i32) -> (i32, i32, i32) {
    %c1_i32 = arith.constant 1 : i32
    %0 = arith.muli %arg0, %c1_i32 : i32
    %1 = arith.addi %0, %arg1 : i32
    %c0_i32 = arith.constant 0 : i32
    %2 = arith.minsi %1, %c0_i32 : i32
    %c0_i32_0 = arith.constant 0 : i32
    %c0_i32_1 = arith.constant 0 : i32
    %c0_i32_2 = arith.constant 0 : i32
    return %c0_i32_0, %2, %c0_i32_1 : i32, i32, i32
  }
  func.func @transform_1(%arg0: i32, %arg1: i32) -> (i32, i32, i32) {
    %c1_i32 = arith.constant 1 : i32
    %0 = arith.muli %arg0, %c1_i32 : i32
    %1 = arith.addi %0, %arg1 : i32
    %c0_i32 = arith.constant 0 : i32
    %2 = arith.minsi %1, %c0_i32 : i32
    %c0_i32_0 = arith.constant 0 : i32
    %c0_i32_1 = arith.constant 0 : i32
    %c0_i32_2 = arith.constant 0 : i32
    return %c0_i32_0, %2, %c0_i32_1 : i32, i32, i32
  }
  func.func @transform_2(%arg0: i32, %arg1: i32) -> (i32, i32, i32) {
    %c0_i32 = arith.constant 0 : i32
    %c0_i32_0 = arith.constant 0 : i32
    %c0_i32_1 = arith.constant 0 : i32
    return %arg0, %c0_i32, %c0_i32_0 : i32, i32, i32
  }
  func.func @transform_3(%arg0: i32, %arg1: i32) -> (i32, i32, i32) {
    %c0_i32 = arith.constant 0 : i32
    %c0_i32_0 = arith.constant 0 : i32
    %c0_i32_1 = arith.constant 0 : i32
    return %arg0, %c0_i32, %c0_i32_0 : i32, i32, i32
  }
}

</mosaic_0001>

<llo_original>
// kernel: binary_dice_loss.1
$region0: #{binary_dice_loss.1}
  #allocation0 [shape = 'u32[]', space=smem, size = 0x4, offset = 0x4, fixed_abs, tag = 'smem constant byte address 0x4 - core index']
  #allocation1 [shape = 'u32[144,128]{1,0:T(1,128)}', space=vmem, size = 0x12000, scoped, tag = 'internal scratch']
  %s0 = inlined_call_operand.vmem [shape: f32[2,8,128], index: 0, kind: input, shape index: {}]
  %s1 = inlined_call_operand.vmem [shape: f32[2,8,128], index: 1, kind: input, shape index: {}]
  %s2 = inlined_call_operand.vmem [shape: f32[1,2,128], index: 2, kind: output, shape index: {0}]
  %s3 = inlined_call_operand.vmem [shape: f32[1,2,128], index: 3, kind: output, shape index: {1}]
  %4 = xla_tuple %s2, %s3
  %s5 = sld [smem:[#allocation0]]
  $region30: #{binary_dice_loss.1} parent=0
    _
  %s7 = ssub.s32 1, %s5
  %s8 = scalar_select 0, %s7, %s5
  // Predicated region
  $region2: #{binary_dice_loss.1} parent=0 // pred_check
    _
  $region3: #{binary_dice_loss.1} parent=0 // pred_check_branch
    %10 = sbr.rel (0) target = $region5
  $region4: #{binary_dice_loss.1} parent=0 // pred_region
    %s11 = sadd.s32 0, 0
    %p12 = scmp.lt.s32.totalorder %s11, 0
    %s13 = scalar_select %p12, %s11, 0
    %p14 = scmp.lt.s32.totalorder %s13, 0
    %s15 = scalar_select %p14, %s13, 0
    %s16 = smul.addr %s15, 8
    %s17 = scalar_lea.vmem %s0, %s16
    %s18 = sadd.s32 0, 0
    %p19 = scmp.lt.s32.totalorder %s18, 0
    %s20 = scalar_select %p19, %s18, 0
  $region5: #{binary_dice_loss.1} parent=0 // pred_fallthru
    _
  // Predicated region
  $region6: #{binary_dice_loss.1} parent=0 // pred_check
    _
  $region7: #{binary_dice_loss.1} parent=0 // pred_check_branch
    %22 = sbr.rel (0) target = $region9
  $region8: #{binary_dice_loss.1} parent=0 // pred_region
    %s23 = sadd.s32 0, 0
    %p24 = scmp.lt.s32.totalorder %s23, 0
    %s25 = scalar_select %p24, %s23, 0
    %p26 = scmp.lt.s32.totalorder %s25, 0
    %s27 = scalar_select %p26, %s25, 0
    %s28 = smul.addr %s27, 8
    %s29 = scalar_lea.vmem %s1, %s28
    %s30 = sadd.s32 0, 0
    %p31 = scmp.lt.s32.totalorder %s30, 0
    %s32 = scalar_select %p31, %s30, 0
  $region9: #{binary_dice_loss.1} parent=0 // pred_fallthru
    _
  %s33 = sadd.s32 0, 0
  %p34 = scmp.lt.s32.totalorder %s33, 0
  %s35 = scalar_select %p34, %s33, 0
  %p36 = scmp.lt.s32.totalorder %s35, 0
  %s37 = scalar_select %p36, %s35, 0
  %s38 = smul.addr %s37, 8
  %s39 = scalar_lea.vmem %s0, %s38
  %s40 = sadd.s32 0, 0
  %p41 = scmp.lt.s32.totalorder %s40, 0
  %s42 = scalar_select %p41, %s40, 0
  %p43 = scmp.lt.s32.totalorder %s42, 0
  %s44 = scalar_select %p43, %s42, 0
  %s45 = smul.addr %s44, 8
  %s46 = scalar_lea.vmem %s1, %s45
  %s47 = sadd.s32 0, 0
  %p48 = scmp.lt.s32.totalorder %s47, 0
  %s49 = scalar_select %p48, %s47, 0
  %p50 = scmp.lt.s32.totalorder %s49, 0
  %s51 = scalar_select %p50, %s49, 0
  %s52 = smul.addr %s51, 8
  %s53 = scalar_lea.vmem %s0, %s52
  %s54 = sadd.s32 0, 0
  %p55 = scmp.lt.s32.totalorder %s54, 0
  %s56 = scalar_select %p55, %s54, 0
  %s57 = sadd.s32 0, 0
  %p58 = scmp.lt.s32.totalorder %s57, 0
  %s59 = scalar_select %p58, %s57, 0
  %p60 = scmp.lt.s32.totalorder %s59, 0
  %s61 = scalar_select %p60, %s59, 0
  %s62 = smul.addr %s61, 8
  %s63 = scalar_lea.vmem %s1, %s62
  %s64 = sadd.s32 0, 0
  %p65 = scmp.lt.s32.totalorder %s64, 0
  %s66 = scalar_select %p65, %s64, 0
  %p67 = scmp.eq.s32.totalorder 0, 0
  // Predicated region
  $region10: #{binary_dice_loss.1} parent=0 // pred_check
    %p68 = pneg %p67
  $region11: #{binary_dice_loss.1} parent=0 // pred_check_branch
    %70 = sbr.rel (%p68) target = $region13
  $region12: #{binary_dice_loss.1} parent=0 // pred_region
    %71 = vst [vmem:[%s2] sm:$0x3] 0.0
    %72 = vst [vmem:[%s3] sm:$0x3] 0.0
  $region13: #{binary_dice_loss.1} parent=0 // pred_fallthru
    _
  %v73 = vld [vmem:[%s53] sm:$0xff]
  %v74 = vld [vmem:[%s53 + $0x8] sm:$0xff]
  %v75 = vld [vmem:[%s63] sm:$0xff]
  %v76 = vld [vmem:[%s63 + $0x8] sm:$0xff]
  %v77 = vmul.f32 %v73, %v75
  %v78 = vmul.f32 %v74, %v76
  %v79 = vadd.f32 %v73, %v75
  %v80 = vadd.f32 %v74, %v76
  %v81 = vld [vmem:[%s2] sm:$0x3]
  %v82 = vrot.slane %v77, 4
  %v83 = vadd.f32 %v77, %v82
  %v84 = vrot.slane %v83, 2
  %v85 = vadd.f32 %v83, %v84
  %v86 = vrot.slane %v85, 1
  %v87 = vadd.f32 %v85, %v86
  %v88 = vrot.slane %v78, 4
  %v89 = vadd.f32 %v78, %v88
  %v90 = vrot.slane %v89, 2
  %v91 = vadd.f32 %v89, %v90
  %v92 = vrot.slane %v91, 1
  %v93 = vadd.f32 %v91, %v92
  %vm96 = vcmask 1041409
  %v97 = vsel %vm96, %v93, %v87
  %v99 = vadd.f32 %v81, %v97
  %100 = vst [vmem:[%s2] sm:$0x3] %v99
  %v101 = vld [vmem:[%s3] sm:$0x3]
  %v102 = vrot.slane %v79, 4
  %v103 = vadd.f32 %v79, %v102
  %v104 = vrot.slane %v103, 2
  %v105 = vadd.f32 %v103, %v104
  %v106 = vrot.slane %v105, 1
  %v107 = vadd.f32 %v105, %v106
  %v108 = vrot.slane %v80, 4
  %v109 = vadd.f32 %v80, %v108
  %v110 = vrot.slane %v109, 2
  %v111 = vadd.f32 %v109, %v110
  %v112 = vrot.slane %v111, 1
  %v113 = vadd.f32 %v111, %v112
  %v116 = vsel %vm96, %v113, %v107
  %v118 = vadd.f32 %v101, %v116
  %119 = vst [vmem:[%s3] sm:$0x3] %v118
  // Predicated region
  $region14: #{binary_dice_loss.1} parent=0 // pred_check
    _
  $region15: #{binary_dice_loss.1} parent=0 // pred_check_branch
    %121 = sbr.rel (0) target = $region17
  $region16: #{binary_dice_loss.1} parent=0 // pred_region
    _
  $region17: #{binary_dice_loss.1} parent=0 // pred_fallthru
    _
  // Predicated region
  $region18: #{binary_dice_loss.1} parent=0 // pred_check
    _
  $region19: #{binary_dice_loss.1} parent=0 // pred_check_branch
    %123 = sbr.rel (0) target = $region21
  $region20: #{binary_dice_loss.1} parent=0 // pred_region
    _
  $region21: #{binary_dice_loss.1} parent=0 // pred_fallthru
    _
  // Predicated region
  $region22: #{binary_dice_loss.1} parent=0 // pred_check
    _
  $region23: #{binary_dice_loss.1} parent=0 // pred_check_branch
    %125 = sbr.rel (0) target = $region25
  $region24: #{binary_dice_loss.1} parent=0 // pred_region
    _
  $region25: #{binary_dice_loss.1} parent=0 // pred_fallthru
    _
  // Predicated region
  $region26: #{binary_dice_loss.1} parent=0 // pred_check
    _
  $region27: #{binary_dice_loss.1} parent=0 // pred_check_branch
    %127 = sbr.rel (0) target = $region29
  $region28: #{binary_dice_loss.1} parent=0 // pred_region
    _
  $region29: #{binary_dice_loss.1} parent=0 // pred_fallthru
    _

</llo_original>
